<compile_context>
chip_gen: v6e
topology: v6e:2x2x1
jax: 0.10.0
libtpu: 0.0.40
codegen_flags: <defaults>
</compile_context>

<pallas_src>
import jax
import jax.numpy as jnp
from jax.experimental import pallas as pl
from jax.experimental.pallas import tpu as pltpu

IN_FEATURES = 2      # len(['x', 'y'])
OUT_FEATURES = 1     # len(['evm'])
NR_LAYERS = 4        # hidden layers
LAYER_SIZE = 40

LANES = 128                                  # lane width (batch tile granularity)
FEAT = ((LAYER_SIZE + 7) // 8) * 8           # 40: feature dim on sublanes (8-aligned)
WO_ROWS = 8                                  # output-weight row padded to one sublane tile
TM_MAX = 4096                                # max row (lane) tile; sweepable 1024-4096

# Hidden-layer / output matmul operand dtype.  f32 by default (PINN accuracy budget,
# see header).  Set to jnp.bfloat16 for ~3x fewer MXU passes at ~1e-3 rel. error
# (then relax the tolerance in __main__ accordingly).
MATMUL_DTYPE = jnp.float32


def _mlp_kernel(x_ref, y_ref,
                w0x_ref, w0y_ref, b0_ref,
                w1_ref, b1_ref,
                w2_ref, b2_ref,
                w3_ref, b3_ref,
                wo_ref, bo_ref,
                o_ref):
    """One row tile (TM rows on lanes) of the EVM MLP.

    Layout: batch on lanes, features on sublanes.
      x_ref, y_ref : [1, TM]        lane-dense input rows
      w0x/w0y/b0   : [FEAT, 1]      layer-0 weight / bias columns
      w1..w3, b1..b3: [FEAT, FEAT] / [FEAT, 1]   transposed hidden weights (h_new = W^T @ h)
      wo           : [8, FEAT]      row 0 = output weights, rows 1-7 zero
      bo           : [1, 1]
      o_ref        : [1, TM]        lane-dense output row
    """
    x = x_ref[...]                                                        # [1, TM]
    y = y_ref[...]                                                        # [1, TM]

    # Layer 0 (2 -> 40): outer-product broadcast FMA on the VPU (no wasted MXU pass).
    h = jnp.tanh(w0x_ref[...] * x + w0y_ref[...] * y + b0_ref[...])      # [FEAT, TM]

    # Hidden layers (40 -> 40): MXU matmuls; tanh/VPU work is only 40 sublanes wide.
    h = jnp.tanh(jnp.dot(w1_ref[...], h.astype(w1_ref.dtype),
                         preferred_element_type=jnp.float32) + b1_ref[...])
    h = jnp.tanh(jnp.dot(w2_ref[...], h.astype(w2_ref.dtype),
                         preferred_element_type=jnp.float32) + b2_ref[...])
    h = jnp.tanh(jnp.dot(w3_ref[...], h.astype(w3_ref.dtype),
                         preferred_element_type=jnp.float32) + b3_ref[...])

    # Output layer (40 -> 1): small MXU matmul keeps the reduction off the XLU.
    out = jnp.dot(wo_ref[...], h.astype(wo_ref.dtype),
                  preferred_element_type=jnp.float32)                     # [8, TM]
    o_ref[...] = (out[0:1, :] + bo_ref[...]).astype(o_ref.dtype)


def _pad2d(a, rows, cols):
    r, c = a.shape
    return jnp.pad(a, ((0, rows - r), (0, cols - c)))


def prepare_params(params):
    """Pad / transpose parameters once (hoisted out of the per-call forward).

    params: list of (w, b) with w in [in, out] layout (weight_norm already folded).
    Returns a flat tuple laid out for the batch-on-lanes kernel:
      (w0x [FEAT,1], w0y [FEAT,1], b0 [FEAT,1],
       w1T [FEAT,FEAT], b1 [FEAT,1], w2T ..., b2 ..., w3T ..., b3 ...,
       wo  [8,FEAT] (row 0 = weights), bo [1,1])
    """
    assert len(params) == NR_LAYERS + 1
    w0, b0 = params[0]                                  # w0: [2, 40], b0: [40]
    out = [
        _pad2d(w0[0:1, :].T, FEAT, 1).astype(jnp.float32),   # layer-0 column for 'x'
        _pad2d(w0[1:2, :].T, FEAT, 1).astype(jnp.float32),   # layer-0 column for 'y'
        _pad2d(b0.reshape(-1, 1), FEAT, 1).astype(jnp.float32),
    ]
    for (w, b) in params[1:NR_LAYERS]:                  # hidden layers 1..3
        out.append(_pad2d(w.T, FEAT, FEAT).astype(MATMUL_DTYPE))    # [out, in]
        out.append(_pad2d(b.reshape(-1, 1), FEAT, 1).astype(jnp.float32))
    wo, bo = params[-1]                                 # wo: [40, 1], bo: [1]
    out.append(_pad2d(wo.T, WO_ROWS, FEAT).astype(MATMUL_DTYPE))    # [8, FEAT], row 0 live
    out.append(bo.reshape(1, 1).astype(jnp.float32))
    return tuple(out)


def _round_up(a, m):
    return ((a + m - 1) // m) * m


def _choose_tiling(n):
    """Row (lane) tile TM and padded row count.

    TM is a multiple of 128 (lanes), capped at TM_MAX; whenever there is more
    than one tile of work the grid step count is kept EVEN so v7x's two
    TensorCores (sharding the 'parallel' axis) stay balanced.
    """
    n128 = _round_up(max(int(n), 1), LANES)
    if n128 <= TM_MAX:
        steps = 2 if n128 >= 2 * LANES else 1
    else:
        steps = pl.cdiv(n128, TM_MAX)
        if steps % 2 == 1:
            steps += 1
    tm = _round_up(pl.cdiv(n128, steps), LANES)
    return tm, steps * tm


def evm_net_forward(input_dict, padded_params):
    """JAX wrapper reproducing PhysicsNeMoEVMNet.forward."""
    x = input_dict["x"].astype(jnp.float32)
    y = input_dict["y"].astype(jnp.float32)
    n = x.shape[0]
    tm, n_pad = _choose_tiling(n)
    grid = n_pad // tm

    # Lane-dense I/O: batch on lanes ([1, n_pad]); contiguous DMAs, no per-row padding.
    x_row = jnp.pad(x.reshape(1, -1), ((0, 0), (0, n_pad - n)))
    y_row = jnp.pad(y.reshape(1, -1), ((0, 0), (0, n_pad - n)))

    row_spec = pl.BlockSpec((1, tm), lambda i: (0, i))         # x / y / out row tiles
    col_spec = pl.BlockSpec((FEAT, 1), lambda i: (0, 0))       # weight/bias columns
    mat_spec = pl.BlockSpec((FEAT, FEAT), lambda i: (0, 0))    # transposed hidden weights
    wo_spec = pl.BlockSpec((WO_ROWS, FEAT), lambda i: (0, 0))  # padded output-weight row
    sca_spec = pl.BlockSpec((1, 1), lambda i: (0, 0))          # output bias

    in_specs = [row_spec, row_spec,              # x, y
                col_spec, col_spec, col_spec,    # w0x, w0y, b0
                mat_spec, col_spec,              # w1T, b1
                mat_spec, col_spec,              # w2T, b2
                mat_spec, col_spec,              # w3T, b3
                wo_spec, sca_spec]               # wo, bo

    out = pl.pallas_call(
        _mlp_kernel,
        out_shape=jax.ShapeDtypeStruct((1, n_pad), jnp.float32),
        grid_spec=pltpu.PrefetchScalarGridSpec(
            num_scalar_prefetch=0,
            grid=(grid,),
            in_specs=in_specs,
            out_specs=pl.BlockSpec((1, tm), lambda i: (0, i)),
        ),
        compiler_params=pltpu.CompilerParams(
            dimension_semantics=("parallel",)),
    )(x_row, y_row, *padded_params)

    # output_dict[key] = output[:, i:i+1]
    return {"evm": out.reshape(n_pad, 1)[:n, 0:1]}


def _weight_norm_weight(v, g):
    """PyTorch weight_norm: w = g * v / ||v|| with norm over input dim (dim=1).

    v: [out, in], g: [out, 1] -> returns [in, out] for x @ W."""
    norm = jnp.sqrt(jnp.sum(v * v, axis=1, keepdims=True))
    w = g * v / norm
    return w.T


def init_params(key):
    """Deterministic synthetic parameters matching FullyConnected(2->40x4->1),
    weight_norm=True (weight_norm folded into the effective weight, as in eval)."""
    dims = [IN_FEATURES] + [LAYER_SIZE] * NR_LAYERS + [OUT_FEATURES]
    params = []
    for li in range(len(dims) - 1):
        d_in, d_out = dims[li], dims[li + 1]
        key, kv, kg, kb = jax.random.split(key, 4)
        v = jax.random.normal(kv, (d_out, d_in), jnp.float32) * (1.0 / jnp.sqrt(d_in))
        g = 1.0 + 0.1 * jax.random.normal(kg, (d_out, 1), jnp.float32)
        b = 0.1 * jax.random.normal(kb, (d_out,), jnp.float32)
        w = _weight_norm_weight(v, g)  # [in, out]
        params.append((w, b))
    return params


def reference_forward(input_dict, params):
    """Pure-JAX reference (same math as the PyTorch module in eval mode)."""
    h = jnp.concatenate([input_dict[k] for k in ("x", "y")], axis=-1)   # [N, 2]
    for (w, b) in params[:NR_LAYERS]:
        h = jnp.tanh(h @ w + b)
    wo, bo = params[-1]
    out = h @ wo + bo
    return {"evm": out[:, 0:1]}


if __name__ == "__main__":
    key = jax.random.PRNGKey(0)
    kparam, kx, ky = jax.random.split(key, 3)

    params = init_params(kparam)
    padded_params = prepare_params(params)   # padded / transposed once, reused every forward

    N = 64  # number of collocation points (small test shape)
    input_dict = {
        "x": jax.random.normal(kx, (N, 1), jnp.float32),
        "y": jax.random.normal(ky, (N, 1), jnp.float32),
    }

    out = evm_net_forward(input_dict, padded_params)
    jax.block_until_ready(out["evm"])

    ref = reference_forward(input_dict, params)
    assert out["evm"].shape == (N, 1)
    # f32 everywhere (MATMUL_DTYPE=f32) -> tight tolerance; relax if bf16 is enabled.
    assert jnp.allclose(out["evm"], ref["evm"], atol=1e-4, rtol=1e-4)

    print("KERNEL_OK")
</pallas_src>

<mosaic_0001>
module attributes {stable_mosaic.version = 11 : i64} {
  func.func @_mlp_kernel(%arg0: i32, %arg1: memref<1x128xf32, #tpu.memory_space<vmem>>, %arg2: memref<1x128xf32, #tpu.memory_space<vmem>>, %arg3: memref<40x1xf32, #tpu.memory_space<vmem>>, %arg4: memref<40x1xf32, #tpu.memory_space<vmem>>, %arg5: memref<40x1xf32, #tpu.memory_space<vmem>>, %arg6: memref<40x40xf32, #tpu.memory_space<vmem>>, %arg7: memref<40x1xf32, #tpu.memory_space<vmem>>, %arg8: memref<40x40xf32, #tpu.memory_space<vmem>>, %arg9: memref<40x1xf32, #tpu.memory_space<vmem>>, %arg10: memref<40x40xf32, #tpu.memory_space<vmem>>, %arg11: memref<40x1xf32, #tpu.memory_space<vmem>>, %arg12: memref<8x40xf32, #tpu.memory_space<vmem>>, %arg13: memref<1x1xf32, #tpu.memory_space<vmem>>, %arg14: memref<1x128xf32, #tpu.memory_space<vmem>>) attributes {dimension_semantics = [#tpu.dimension_semantics<parallel>], iteration_bounds = array<i64: 1>, scalar_prefetch = 0 : i64, scratch_operands = 0 : i64, tpu.core_type = #tpu.core_type<tc>, window_params = [{transform_indices = @transform_0, window_bounds = array<i64: 1, 128>}, {transform_indices = @transform_1, window_bounds = array<i64: 1, 128>}, {pipeline_mode = #tpu.pipeline_mode<synchronous>, transform_indices = @transform_2, window_bounds = array<i64: 40, 1>}, {pipeline_mode = #tpu.pipeline_mode<synchronous>, transform_indices = @transform_3, window_bounds = array<i64: 40, 1>}, {pipeline_mode = #tpu.pipeline_mode<synchronous>, transform_indices = @transform_4, window_bounds = array<i64: 40, 1>}, {pipeline_mode = #tpu.pipeline_mode<synchronous>, transform_indices = @transform_5, window_bounds = array<i64: 40, 40>}, {pipeline_mode = #tpu.pipeline_mode<synchronous>, transform_indices = @transform_6, window_bounds = array<i64: 40, 1>}, {pipeline_mode = #tpu.pipeline_mode<synchronous>, transform_indices = @transform_7, window_bounds = array<i64: 40, 40>}, {pipeline_mode = #tpu.pipeline_mode<synchronous>, transform_indices = @transform_8, window_bounds = array<i64: 40, 1>}, {pipeline_mode = #tpu.pipeline_mode<synchronous>, transform_indices = @transform_9, window_bounds = array<i64: 40, 40>}, {pipeline_mode = #tpu.pipeline_mode<synchronous>, transform_indices = @transform_10, window_bounds = array<i64: 40, 1>}, {pipeline_mode = #tpu.pipeline_mode<synchronous>, transform_indices = @transform_11, window_bounds = array<i64: 8, 40>}, {pipeline_mode = #tpu.pipeline_mode<synchronous>, transform_indices = @transform_12, window_bounds = array<i64: 1, 1>}, {transform_indices = @transform_13, window_bounds = array<i64: 1, 128>}]} {
    %c0 = arith.constant 0 : index
    %c0_0 = arith.constant 0 : index
    %0 = vector.load %arg1[%c0, %c0_0] : memref<1x128xf32, #tpu.memory_space<vmem>>, vector<1x128xf32>
    %c0_1 = arith.constant 0 : index
    %c0_2 = arith.constant 0 : index
    %1 = vector.load %arg2[%c0_1, %c0_2] : memref<1x128xf32, #tpu.memory_space<vmem>>, vector<1x128xf32>
    %c0_3 = arith.constant 0 : index
    %c0_4 = arith.constant 0 : index
    %2 = vector.load %arg3[%c0_3, %c0_4] : memref<40x1xf32, #tpu.memory_space<vmem>>, vector<40x1xf32>
    %3 = vector.broadcast %2 : vector<40x1xf32> to vector<40x128xf32>
    %4 = vector.broadcast %0 : vector<1x128xf32> to vector<40x128xf32>
    %5 = arith.mulf %3, %4 : vector<40x128xf32>
    %c0_5 = arith.constant 0 : index
    %c0_6 = arith.constant 0 : index
    %6 = vector.load %arg4[%c0_5, %c0_6] : memref<40x1xf32, #tpu.memory_space<vmem>>, vector<40x1xf32>
    %7 = vector.broadcast %6 : vector<40x1xf32> to vector<40x128xf32>
    %8 = vector.broadcast %1 : vector<1x128xf32> to vector<40x128xf32>
    %9 = arith.mulf %7, %8 : vector<40x128xf32>
    %10 = arith.addf %5, %9 : vector<40x128xf32>
    %c0_7 = arith.constant 0 : index
    %c0_8 = arith.constant 0 : index
    %11 = vector.load %arg5[%c0_7, %c0_8] : memref<40x1xf32, #tpu.memory_space<vmem>>, vector<40x1xf32>
    %12 = vector.broadcast %11 : vector<40x1xf32> to vector<40x128xf32>
    %13 = arith.addf %10, %12 : vector<40x128xf32>
    %14 = math.tanh %13 : vector<40x128xf32>
    %c0_9 = arith.constant 0 : index
    %c0_10 = arith.constant 0 : index
    %15 = vector.load %arg6[%c0_9, %c0_10] : memref<40x40xf32, #tpu.memory_space<vmem>>, vector<40x40xf32>
    %cst = arith.constant dense<0.000000e+00> : vector<40x128xf32>
    %16 = tpu.matmul %15, %14, %cst {dimension_numbers = #tpu.dot_dimension_numbers<[1], [0], [0], [1], [0, 0, 1, 1], [], []>} : vector<40x40xf32>, vector<40x128xf32>, vector<40x128xf32> -> vector<40x128xf32>
    %c0_11 = arith.constant 0 : index
    %c0_12 = arith.constant 0 : index
    %17 = vector.load %arg7[%c0_11, %c0_12] : memref<40x1xf32, #tpu.memory_space<vmem>>, vector<40x1xf32>
    %18 = vector.broadcast %17 : vector<40x1xf32> to vector<40x128xf32>
    %19 = arith.addf %16, %18 : vector<40x128xf32>
    %20 = math.tanh %19 : vector<40x128xf32>
    %c0_13 = arith.constant 0 : index
    %c0_14 = arith.constant 0 : index
    %21 = vector.load %arg8[%c0_13, %c0_14] : memref<40x40xf32, #tpu.memory_space<vmem>>, vector<40x40xf32>
    %cst_15 = arith.constant dense<0.000000e+00> : vector<40x128xf32>
    %22 = tpu.matmul %21, %20, %cst_15 {dimension_numbers = #tpu.dot_dimension_numbers<[1], [0], [0], [1], [0, 0, 1, 1], [], []>} : vector<40x40xf32>, vector<40x128xf32>, vector<40x128xf32> -> vector<40x128xf32>
    %c0_16 = arith.constant 0 : index
    %c0_17 = arith.constant 0 : index
    %23 = vector.load %arg9[%c0_16, %c0_17] : memref<40x1xf32, #tpu.memory_space<vmem>>, vector<40x1xf32>
    %24 = vector.broadcast %23 : vector<40x1xf32> to vector<40x128xf32>
    %25 = arith.addf %22, %24 : vector<40x128xf32>
    %26 = math.tanh %25 : vector<40x128xf32>
    %c0_18 = arith.constant 0 : index
    %c0_19 = arith.constant 0 : index
    %27 = vector.load %arg10[%c0_18, %c0_19] : memref<40x40xf32, #tpu.memory_space<vmem>>, vector<40x40xf32>
    %cst_20 = arith.constant dense<0.000000e+00> : vector<40x128xf32>
    %28 = tpu.matmul %27, %26, %cst_20 {dimension_numbers = #tpu.dot_dimension_numbers<[1], [0], [0], [1], [0, 0, 1, 1], [], []>} : vector<40x40xf32>, vector<40x128xf32>, vector<40x128xf32> -> vector<40x128xf32>
    %c0_21 = arith.constant 0 : index
    %c0_22 = arith.constant 0 : index
    %29 = vector.load %arg11[%c0_21, %c0_22] : memref<40x1xf32, #tpu.memory_space<vmem>>, vector<40x1xf32>
    %30 = vector.broadcast %29 : vector<40x1xf32> to vector<40x128xf32>
    %31 = arith.addf %28, %30 : vector<40x128xf32>
    %32 = math.tanh %31 : vector<40x128xf32>
    %c0_23 = arith.constant 0 : index
    %c0_24 = arith.constant 0 : index
    %33 = vector.load %arg12[%c0_23, %c0_24] : memref<8x40xf32, #tpu.memory_space<vmem>>, vector<8x40xf32>
    %cst_25 = arith.constant dense<0.000000e+00> : vector<8x128xf32>
    %34 = tpu.matmul %33, %32, %cst_25 {dimension_numbers = #tpu.dot_dimension_numbers<[1], [0], [0], [1], [0, 0, 1, 1], [], []>} : vector<8x40xf32>, vector<40x128xf32>, vector<8x128xf32> -> vector<8x128xf32>
    %35 = vector.extract_strided_slice %34 {offsets = [0, 0], sizes = [1, 128], strides = [1, 1]} : vector<8x128xf32> to vector<1x128xf32>
    %c0_26 = arith.constant 0 : index
    %c0_27 = arith.constant 0 : index
    %36 = vector.load %arg13[%c0_26, %c0_27] : memref<1x1xf32, #tpu.memory_space<vmem>>, vector<1x1xf32>
    %37 = vector.broadcast %36 : vector<1x1xf32> to vector<1x128xf32>
    %38 = arith.addf %35, %37 : vector<1x128xf32>
    %c0_28 = arith.constant 0 : index
    %c0_29 = arith.constant 0 : index
    %39 = vector.load %arg14[%c0_28, %c0_29] : memref<1x128xf32, #tpu.memory_space<vmem>>, vector<1x128xf32>
    tpu.vector_store %arg14[%c0_28, %c0_29], %38 {strides = array<i32>} : memref<1x128xf32, #tpu.memory_space<vmem>>, vector<1x128xf32>,
    return
  }
  func.func @transform_0(%arg0: i32) -> (i32, i32) {
    %c0_i32 = arith.constant 0 : i32
    %c0_i32_0 = arith.constant 0 : i32
    return %c0_i32, %arg0 : i32, i32
  }
  func.func @transform_1(%arg0: i32) -> (i32, i32) {
    %c0_i32 = arith.constant 0 : i32
    %c0_i32_0 = arith.constant 0 : i32
    return %c0_i32, %arg0 : i32, i32
  }
  func.func @transform_2(%arg0: i32) -> (i32, i32) {
    %c0_i32 = arith.constant 0 : i32
    %c0_i32_0 = arith.constant 0 : i32
    %c0_i32_1 = arith.constant 0 : i32
    return %c0_i32, %c0_i32_0 : i32, i32
  }
  func.func @transform_3(%arg0: i32) -> (i32, i32) {
    %c0_i32 = arith.constant 0 : i32
    %c0_i32_0 = arith.constant 0 : i32
    %c0_i32_1 = arith.constant 0 : i32
    return %c0_i32, %c0_i32_0 : i32, i32
  }
  func.func @transform_4(%arg0: i32) -> (i32, i32) {
    %c0_i32 = arith.constant 0 : i32
    %c0_i32_0 = arith.constant 0 : i32
    %c0_i32_1 = arith.constant 0 : i32
    return %c0_i32, %c0_i32_0 : i32, i32
  }
  func.func @transform_5(%arg0: i32) -> (i32, i32) {
    %c0_i32 = arith.constant 0 : i32
    %c0_i32_0 = arith.constant 0 : i32
    %c0_i32_1 = arith.constant 0 : i32
    return %c0_i32, %c0_i32_0 : i32, i32
  }
  func.func @transform_6(%arg0: i32) -> (i32, i32) {
    %c0_i32 = arith.constant 0 : i32
    %c0_i32_0 = arith.constant 0 : i32
    %c0_i32_1 = arith.constant 0 : i32
    return %c0_i32, %c0_i32_0 : i32, i32
  }
  func.func @transform_7(%arg0: i32) -> (i32, i32) {
    %c0_i32 = arith.constant 0 : i32
    %c0_i32_0 = arith.constant 0 : i32
    %c0_i32_1 = arith.constant 0 : i32
    return %c0_i32, %c0_i32_0 : i32, i32
  }
  func.func @transform_8(%arg0: i32) -> (i32, i32) {
    %c0_i32 = arith.constant 0 : i32
    %c0_i32_0 = arith.constant 0 : i32
    %c0_i32_1 = arith.constant 0 : i32
    return %c0_i32, %c0_i32_0 : i32, i32
  }
  func.func @transform_9(%arg0: i32) -> (i32, i32) {
    %c0_i32 = arith.constant 0 : i32
    %c0_i32_0 = arith.constant 0 : i32
    %c0_i32_1 = arith.constant 0 : i32
    return %c0_i32, %c0_i32_0 : i32, i32
  }
  func.func @transform_10(%arg0: i32) -> (i32, i32) {
    %c0_i32 = arith.constant 0 : i32
    %c0_i32_0 = arith.constant 0 : i32
    %c0_i32_1 = arith.constant 0 : i32
    return %c0_i32, %c0_i32_0 : i32, i32
  }
  func.func @transform_11(%arg0: i32) -> (i32, i32) {
    %c0_i32 = arith.constant 0 : i32
    %c0_i32_0 = arith.constant 0 : i32
    %c0_i32_1 = arith.constant 0 : i32
    return %c0_i32, %c0_i32_0 : i32, i32
  }
  func.func @transform_12(%arg0: i32) -> (i32, i32) {
    %c0_i32 = arith.constant 0 : i32
    %c0_i32_0 = arith.constant 0 : i32
    %c0_i32_1 = arith.constant 0 : i32
    return %c0_i32, %c0_i32_0 : i32, i32
  }
  func.func @transform_13(%arg0: i32) -> (i32, i32) {
    %c0_i32 = arith.constant 0 : i32
    %c0_i32_0 = arith.constant 0 : i32
    return %c0_i32, %arg0 : i32, i32
  }
}

</mosaic_0001>

<llo_original>
// kernel: tpu_custom_call.1
$region0: #{tpu_custom_call.1}
  #allocation0 [shape = 'u32[]', space=smem, size = 0x4, offset = 0x4, fixed_abs, tag = 'smem constant byte address 0x4 - core index']
  #allocation1 [shape = 'u32[144,128]{1,0:T(1,128)}', space=vmem, size = 0x12000, scoped, tag = 'internal scratch']
  #allocation2 [shape = 'f32[1,1]{1,0:T(1,128)S(1)}', space=vmem, size = 0x200, scoped, tag = 'scoped memory for tpu_custom_call.1']
  %s0 = inlined_call_operand.vmem [shape: f32[1,128], index: 0, kind: input, shape index: {}]
  %s1 = inlined_call_operand.vmem [shape: f32[1,128], index: 1, kind: input, shape index: {}]
  %s2 = inlined_call_operand.vmem [shape: f32[40,1], index: 2, kind: input, shape index: {}]
  %s3 = inlined_call_operand.vmem [shape: f32[40,1], index: 3, kind: input, shape index: {}]
  %s4 = inlined_call_operand.vmem [shape: f32[40,1], index: 4, kind: input, shape index: {}]
  %s5 = inlined_call_operand.vmem [shape: f32[40,40], index: 5, kind: input, shape index: {}]
  %s6 = inlined_call_operand.vmem [shape: f32[40,1], index: 6, kind: input, shape index: {}]
  %s7 = inlined_call_operand.vmem [shape: f32[40,40], index: 7, kind: input, shape index: {}]
  %s8 = inlined_call_operand.vmem [shape: f32[40,1], index: 8, kind: input, shape index: {}]
  %s9 = inlined_call_operand.vmem [shape: f32[40,40], index: 9, kind: input, shape index: {}]
  %s10 = inlined_call_operand.vmem [shape: f32[40,1], index: 10, kind: input, shape index: {}]
  %s11 = inlined_call_operand.vmem [shape: f32[8,40], index: 11, kind: input, shape index: {}]
  %s12 = inlined_call_operand.<no memory space> [shape: f32[1,1], index: 12, kind: input, shape index: {}]
  %s13 = inlined_call_operand.hbm [shape: f32[1,128], index: 13, kind: output, shape index: {}]
  %s14 = sld [smem:[#allocation0]]
  $region62: #{tpu_custom_call.1} parent=0
    _
  %s16 = ssub.s32 1, %s14
  %s17 = scalar_select 0, %s16, %s14
  %v18 = vstv %s12
  %19 = vst [vmem:[#allocation2] sm:$0x1] %v18
  $region1: #{tpu_custom_call.1} parent=0
    #allocation3 [shape = 'u8[512]{0}', space=vmem, size = 0x400, scoped, tag = 'output window, operand 0, single buffered']
    #allocation4 [shape = 's32[1]{0}', space=sflag, size = 0x4, scoped, tag = 'scoped memory for tpu_custom_call.1']
    %20 = vsyncpa [#allocation4], 0
    // Predicated region
    $region2: #{tpu_custom_call.1} parent=1 // pred_check
      _
    $region3: #{tpu_custom_call.1} parent=1 // pred_check_branch
      %22 = sbr.rel (0) target = $region5
    $region4: #{tpu_custom_call.1} parent=1 // pred_region
      _
    $region5: #{tpu_custom_call.1} parent=1 // pred_fallthru
      _
    // Predicated region
    $region6: #{tpu_custom_call.1} parent=1 // pred_check
      _
    $region7: #{tpu_custom_call.1} parent=1 // pred_check_branch
      %24 = sbr.rel (0) target = $region9
    $region8: #{tpu_custom_call.1} parent=1 // pred_region
      _
    $region9: #{tpu_custom_call.1} parent=1 // pred_fallthru
      _
    // Predicated region
    $region10: #{tpu_custom_call.1} parent=1 // pred_check
      _
    $region11: #{tpu_custom_call.1} parent=1 // pred_check_branch
      %26 = sbr.rel (0) target = $region13
    $region12: #{tpu_custom_call.1} parent=1 // pred_region
      _
    $region13: #{tpu_custom_call.1} parent=1 // pred_fallthru
      _
    // Predicated region
    $region14: #{tpu_custom_call.1} parent=1 // pred_check
      _
    $region15: #{tpu_custom_call.1} parent=1 // pred_check_branch
      %28 = sbr.rel (0) target = $region17
    $region16: #{tpu_custom_call.1} parent=1 // pred_region
      _
    $region17: #{tpu_custom_call.1} parent=1 // pred_fallthru
      _
    // Predicated region
    $region18: #{tpu_custom_call.1} parent=1 // pred_check
      _
    $region19: #{tpu_custom_call.1} parent=1 // pred_check_branch
      %30 = sbr.rel (0) target = $region21
    $region20: #{tpu_custom_call.1} parent=1 // pred_region
      _
    $region21: #{tpu_custom_call.1} parent=1 // pred_fallthru
      _
    // Predicated region
    $region22: #{tpu_custom_call.1} parent=1 // pred_check
      _
    $region23: #{tpu_custom_call.1} parent=1 // pred_check_branch
      %32 = sbr.rel (0) target = $region25
    $region24: #{tpu_custom_call.1} parent=1 // pred_region
      _
    $region25: #{tpu_custom_call.1} parent=1 // pred_fallthru
      _
    // Predicated region
    $region26: #{tpu_custom_call.1} parent=1 // pred_check
      _
    $region27: #{tpu_custom_call.1} parent=1 // pred_check_branch
      %34 = sbr.rel (0) target = $region29
    $region28: #{tpu_custom_call.1} parent=1 // pred_region
      _
    $region29: #{tpu_custom_call.1} parent=1 // pred_fallthru
      _
    // Predicated region
    $region30: #{tpu_custom_call.1} parent=1 // pred_check
      _
    $region31: #{tpu_custom_call.1} parent=1 // pred_check_branch
      %36 = sbr.rel (0) target = $region33
    $region32: #{tpu_custom_call.1} parent=1 // pred_region
      _
    $region33: #{tpu_custom_call.1} parent=1 // pred_fallthru
      _
    // Predicated region
    $region34: #{tpu_custom_call.1} parent=1 // pred_check
      _
    $region35: #{tpu_custom_call.1} parent=1 // pred_check_branch
      %38 = sbr.rel (0) target = $region37
    $region36: #{tpu_custom_call.1} parent=1 // pred_region
      _
    $region37: #{tpu_custom_call.1} parent=1 // pred_fallthru
      _
    // Predicated region
    $region38: #{tpu_custom_call.1} parent=1 // pred_check
      _
    $region39: #{tpu_custom_call.1} parent=1 // pred_check_branch
      %40 = sbr.rel (0) target = $region41
    $region40: #{tpu_custom_call.1} parent=1 // pred_region
      _
    $region41: #{tpu_custom_call.1} parent=1 // pred_fallthru
      _
    // Predicated region
    $region42: #{tpu_custom_call.1} parent=1 // pred_check
      _
    $region43: #{tpu_custom_call.1} parent=1 // pred_check_branch
      %42 = sbr.rel (0) target = $region45
    $region44: #{tpu_custom_call.1} parent=1 // pred_region
      _
    $region45: #{tpu_custom_call.1} parent=1 // pred_fallthru
      _
    // Predicated region
    $region46: #{tpu_custom_call.1} parent=1 // pred_check
      _
    $region47: #{tpu_custom_call.1} parent=1 // pred_check_branch
      %44 = sbr.rel (0) target = $region49
    $region48: #{tpu_custom_call.1} parent=1 // pred_region
      _
    $region49: #{tpu_custom_call.1} parent=1 // pred_fallthru
      _
    // Predicated region
    $region50: #{tpu_custom_call.1} parent=1 // pred_check
      _
    $region51: #{tpu_custom_call.1} parent=1 // pred_check_branch
      %46 = sbr.rel (0) target = $region53
    $region52: #{tpu_custom_call.1} parent=1 // pred_region
      _
    $region53: #{tpu_custom_call.1} parent=1 // pred_fallthru
      _
    %v47 = vld [vmem:[%s0] sm:$0x1]
    %v48 = vld [vmem:[%s1] sm:$0x1]
    %v49 = vld [vmem:[%s2] sm:$0xff]
    %v50 = vld [vmem:[%s2 + $0x8] sm:$0xff]
    %v51 = vld [vmem:[%s2 + $0x10] sm:$0xff]
    %v52 = vld [vmem:[%s2 + $0x18] sm:$0xff]
    %v53 = vld [vmem:[%s2 + $0x20] sm:$0xff]
    %55 = vset.pattern.permute.xlu0 0
    %56 = vperm.xlu0 %55, %v49
    %v57 = vpop.permute.xlu0 %56
    %60 = vset.pattern.permute.xlu0 0
    %61 = vperm.xlu0 %60, %v50
    %v62 = vpop.permute.xlu0 %61
    %65 = vset.pattern.permute.xlu0 0
    %66 = vperm.xlu0 %65, %v51
    %v67 = vpop.permute.xlu0 %66
    %70 = vset.pattern.permute.xlu0 0
    %71 = vperm.xlu0 %70, %v52
    %v72 = vpop.permute.xlu0 %71
    %75 = vset.pattern.permute.xlu0 0
    %76 = vperm.xlu0 %75, %v53
    %v77 = vpop.permute.xlu0 %76
    %v80 = vlaneseq
    %v81 = vshrl.u32 %v80, 7
    %v82 = vsub.s32 0, %v81
    %v83 = vrot.slane %v47, %v82
    %v85 = vmul.f32 %v57, %v83
    %v86 = vmul.f32 %v62, %v83
    %v87 = vmul.f32 %v67, %v83
    %v88 = vmul.f32 %v72, %v83
    %v89 = vmul.f32 %v77, %v83
    %v90 = vld [vmem:[%s3] sm:$0xff]
    %v91 = vld [vmem:[%s3 + $0x8] sm:$0xff]
    %v92 = vld [vmem:[%s3 + $0x10] sm:$0xff]
    %v93 = vld [vmem:[%s3 + $0x18] sm:$0xff]
    %v94 = vld [vmem:[%s3 + $0x20] sm:$0xff]
    %96 = vset.pattern.permute.xlu0 0
    %97 = vperm.xlu0 %96, %v90
    %v98 = vpop.permute.xlu0 %97
    %101 = vset.pattern.permute.xlu0 0
    %102 = vperm.xlu0 %101, %v91
    %v103 = vpop.permute.xlu0 %102
    %106 = vset.pattern.permute.xlu0 0
    %107 = vperm.xlu0 %106, %v92
    %v108 = vpop.permute.xlu0 %107
    %111 = vset.pattern.permute.xlu0 0
    %112 = vperm.xlu0 %111, %v93
    %v113 = vpop.permute.xlu0 %112
    %116 = vset.pattern.permute.xlu0 0
    %117 = vperm.xlu0 %116, %v94
    %v118 = vpop.permute.xlu0 %117
    %v121 = vlaneseq
    %v122 = vshrl.u32 %v121, 7
    %v123 = vsub.s32 0, %v122
    %v124 = vrot.slane %v48, %v123
    %v126 = vmul.f32 %v98, %v124
    %v127 = vmul.f32 %v103, %v124
    %v128 = vmul.f32 %v108, %v124
    %v129 = vmul.f32 %v113, %v124
    %v130 = vmul.f32 %v118, %v124
    %v131 = vadd.f32 %v85, %v126
    %v132 = vadd.f32 %v86, %v127
    %v133 = vadd.f32 %v87, %v128
    %v134 = vadd.f32 %v88, %v129
    %v135 = vadd.f32 %v89, %v130
    %v136 = vld [vmem:[%s4] sm:$0xff]
    %v137 = vld [vmem:[%s4 + $0x8] sm:$0xff]
    %v138 = vld [vmem:[%s4 + $0x10] sm:$0xff]
    %v139 = vld [vmem:[%s4 + $0x18] sm:$0xff]
    %v140 = vld [vmem:[%s4 + $0x20] sm:$0xff]
    %142 = vset.pattern.permute.xlu0 0
    %143 = vperm.xlu0 %142, %v136
    %v144 = vpop.permute.xlu0 %143
    %147 = vset.pattern.permute.xlu0 0
    %148 = vperm.xlu0 %147, %v137
    %v149 = vpop.permute.xlu0 %148
    %152 = vset.pattern.permute.xlu0 0
    %153 = vperm.xlu0 %152, %v138
    %v154 = vpop.permute.xlu0 %153
    %157 = vset.pattern.permute.xlu0 0
    %158 = vperm.xlu0 %157, %v139
    %v159 = vpop.permute.xlu0 %158
    %162 = vset.pattern.permute.xlu0 0
    %163 = vperm.xlu0 %162, %v140
    %v164 = vpop.permute.xlu0 %163
    %v166 = vadd.f32 %v131, %v144
    %v167 = vadd.f32 %v132, %v149
    %v168 = vadd.f32 %v133, %v154
    %v169 = vadd.f32 %v134, %v159
    %v170 = vadd.f32 %v135, %v164
    %v171 = vtanh.pop %v166
    %v172 = vtanh.pop %v167
    %v173 = vtanh.pop %v168
    %v174 = vtanh.pop %v169
    %v175 = vtanh.pop %v170
    %v176 = vld [vmem:[%s5] sm:$0xff]
    %v177 = vld [vmem:[%s5 + $0x8] sm:$0xff]
    %v178 = vld [vmem:[%s5 + $0x10] sm:$0xff]
    %v179 = vld [vmem:[%s5 + $0x18] sm:$0xff]
    %v180 = vld [vmem:[%s5 + $0x20] sm:$0xff]
    %v181 = vld [vmem:[%s6] sm:$0xff]
    %v182 = vld [vmem:[%s6 + $0x8] sm:$0xff]
    %v183 = vld [vmem:[%s6 + $0x10] sm:$0xff]
    %v184 = vld [vmem:[%s6 + $0x18] sm:$0xff]
    %v185 = vld [vmem:[%s6 + $0x20] sm:$0xff]
    %187 = vset.pattern.permute.xlu0 0
    %188 = vperm.xlu0 %187, %v181
    %v189 = vpop.permute.xlu0 %188
    %192 = vset.pattern.permute.xlu0 0
    %193 = vperm.xlu0 %192, %v182
    %v194 = vpop.permute.xlu0 %193
    %197 = vset.pattern.permute.xlu0 0
    %198 = vperm.xlu0 %197, %v183
    %v199 = vpop.permute.xlu0 %198
    %202 = vset.pattern.permute.xlu0 0
    %203 = vperm.xlu0 %202, %v184
    %v204 = vpop.permute.xlu0 %203
    %207 = vset.pattern.permute.xlu0 0
    %208 = vperm.xlu0 %207, %v185
    %v209 = vpop.permute.xlu0 %208
    %vm211 = vcmask 326656
    %v213 = vsel %vm211, %v176, 0
    %v216 = vsel %vm211, %v177, 0
    %v219 = vsel %vm211, %v178, 0
    %v222 = vsel %vm211, %v179, 0
    %v225 = vsel %vm211, %v180, 0
    %227 = vmatprep.subr.mxu0 0.0
    %228 = vmatpush1.msra.mxu0 0.0
    %229 = vmatprep.subr.mxu0 0.0
    %230 = vmatpush1.msra.mxu0 0.0
    %231 = vmatprep.subr.mxu0 0.0
    %232 = vmatpush1.msra.mxu0 0.0
    %233 = vmatprep.subr.mxu0 0.0
    %234 = vmatpush1.msra.mxu0 0.0
    %235 = vmatprep.subr.mxu0 0.0
    %236 = vmatpush1.msra.mxu0 0.0
    %237 = vmatprep.subr.mxu0 0.0
    %238 = vmatpush1.msra.mxu0 0.0
    %239 = vmatprep.subr.mxu0 0.0
    %240 = vmatpush1.msra.mxu0 0.0
    %241 = vmatprep.subr.mxu0 0.0
    %242 = vmatpush1.msra.mxu0 0.0
    %243 = vmatprep.subr.mxu0 0.0
    %244 = vmatpush1.msra.mxu0 0.0
    %245 = vmatprep.subr.mxu0 0.0
    %246 = vmatpush1.msra.mxu0 0.0
    %247 = vmatprep.subr.mxu0 0.0
    %248 = vmatpush1.msra.mxu0 0.0
    %249 = vmatprep.subr.mxu0 0.0
    %250 = vmatpush1.msra.mxu0 %v175
    %251 = vmatprep.subr.mxu0 0.0
    %252 = vmatpush1.msra.mxu0 %v174
    %253 = vmatprep.subr.mxu0 0.0
    %254 = vmatpush1.msra.mxu0 %v173
    %255 = vmatprep.subr.mxu0 0.0
    %256 = vmatpush1.msra.mxu0 %v172
    %257 = vmatprep.subr.mxu0 0.0
    %258 = vmatpush1.msra.mxu0 %v171
    %259 = vmatprep.subr.mxu0 0.0
    %260 = vmatpush2.msra.mxu0 0.0
    %261 = vmatprep.subr.mxu0 0.0
    %262 = vmatpush2.msra.mxu0 0.0
    %263 = vmatprep.subr.mxu0 0.0
    %264 = vmatpush2.msra.mxu0 0.0
    %265 = vmatprep.subr.mxu0 0.0
    %266 = vmatpush2.msra.mxu0 0.0
    %267 = vmatprep.subr.mxu0 0.0
    %268 = vmatpush2.msra.mxu0 0.0
    %269 = vmatprep.subr.mxu0 0.0
    %270 = vmatpush2.msra.mxu0 0.0
    %271 = vmatprep.subr.mxu0 0.0
    %272 = vmatpush2.msra.mxu0 0.0
    %273 = vmatprep.subr.mxu0 0.0
    %274 = vmatpush2.msra.mxu0 0.0
    %275 = vmatprep.subr.mxu0 0.0
    %276 = vmatpush2.msra.mxu0 0.0
    %277 = vmatprep.subr.mxu0 0.0
    %278 = vmatpush2.msra.mxu0 0.0
    %279 = vmatprep.subr.mxu0 0.0
    %280 = vmatpush2.msra.mxu0 0.0
    %281 = vmatprep.subr.mxu0 0.0
    %282 = vmatpush2.msra.mxu0 0.0
    %283 = vmatprep.subr.mxu0 0.0
    %284 = vmatpush2.msra.mxu0 0.0
    %285 = vmatprep.subr.mxu0 0.0
    %286 = vmatpush2.msra.mxu0 0.0
    %287 = vmatprep.subr.mxu0 0.0
    %288 = vmatpush2.msra.mxu0 0.0
    %289 = vmatprep.subr.mxu0 0.0
    %290 = vmatpush2.msra.mxu0 0.0
    %291 = vmatprep.mubr.f32.mxu0 0.0
    %292 = vmatmul.mubr.f32.gmra.mxu0 %v213
    %v293 = vpop.f32.mrf.mxu0
    %v294 = vadd.f32 %v189, %v293
    %v295 = vpop.f32.mrf.mxu0
    %296 = vmatprep.mubr.f32.mxu0 0.0
    %297 = vmatmul.mubr.f32.gmra.mxu0 %v216
    %v298 = vpop.f32.mrf.mxu0
    %v299 = vadd.f32 %v194, %v298
    %v300 = vpop.f32.mrf.mxu0
    %301 = vmatprep.mubr.f32.mxu0 0.0
    %302 = vmatmul.mubr.f32.gmra.mxu0 %v219
    %v303 = vpop.f32.mrf.mxu0
    %v304 = vadd.f32 %v199, %v303
    %v305 = vpop.f32.mrf.mxu0
    %306 = vmatprep.mubr.f32.mxu0 0.0
    %307 = vmatmul.mubr.f32.gmra.mxu0 %v222
    %v308 = vpop.f32.mrf.mxu0
    %v309 = vadd.f32 %v204, %v308
    %v310 = vpop.f32.mrf.mxu0
    %311 = vmatprep.mubr.f32.mxu0 0.0
    %312 = vmatmul.mubr.f32.gmra.mxu0 %v225
    %v313 = vpop.f32.mrf.mxu0
    %v314 = vadd.f32 %v209, %v313
    %v315 = vpop.f32.mrf.mxu0
    %316 = vdwg.mxu0
    %v317 = vtanh.pop %v294
    %v318 = vtanh.pop %v299
    %v319 = vtanh.pop %v304
    %v320 = vtanh.pop %v309
    %v321 = vtanh.pop %v314
    %v322 = vld [vmem:[%s7] sm:$0xff]
    %v323 = vld [vmem:[%s7 + $0x8] sm:$0xff]
    %v324 = vld [vmem:[%s7 + $0x10] sm:$0xff]
    %v325 = vld [vmem:[%s7 + $0x18] sm:$0xff]
    %v326 = vld [vmem:[%s7 + $0x20] sm:$0xff]
    %v327 = vld [vmem:[%s8] sm:$0xff]
    %v328 = vld [vmem:[%s8 + $0x8] sm:$0xff]
    %v329 = vld [vmem:[%s8 + $0x10] sm:$0xff]
    %v330 = vld [vmem:[%s8 + $0x18] sm:$0xff]
    %v331 = vld [vmem:[%s8 + $0x20] sm:$0xff]
    %333 = vset.pattern.permute.xlu0 0
    %334 = vperm.xlu0 %333, %v327
    %v335 = vpop.permute.xlu0 %334
    %338 = vset.pattern.permute.xlu0 0
    %339 = vperm.xlu0 %338, %v328
    %v340 = vpop.permute.xlu0 %339
    %343 = vset.pattern.permute.xlu0 0
    %344 = vperm.xlu0 %343, %v329
    %v345 = vpop.permute.xlu0 %344
    %348 = vset.pattern.permute.xlu0 0
    %349 = vperm.xlu0 %348, %v330
    %v350 = vpop.permute.xlu0 %349
    %353 = vset.pattern.permute.xlu0 0
    %354 = vperm.xlu0 %353, %v331
    %v355 = vpop.permute.xlu0 %354
    %v358 = vsel %vm211, %v322, 0
    %v361 = vsel %vm211, %v323, 0
    %v364 = vsel %vm211, %v324, 0
    %v367 = vsel %vm211, %v325, 0
    %v370 = vsel %vm211, %v326, 0
    %372 = vmatprep.subr.mxu0 0.0
    %373 = vmatpush1.msra.mxu0 0.0
    %374 = vmatprep.subr.mxu0 0.0
    %375 = vmatpush1.msra.mxu0 0.0
    %376 = vmatprep.subr.mxu0 0.0
    %377 = vmatpush1.msra.mxu0 0.0
    %378 = vmatprep.subr.mxu0 0.0
    %379 = vmatpush1.msra.mxu0 0.0
    %380 = vmatprep.subr.mxu0 0.0
    %381 = vmatpush1.msra.mxu0 0.0
    %382 = vmatprep.subr.mxu0 0.0
    %383 = vmatpush1.msra.mxu0 0.0
    %384 = vmatprep.subr.mxu0 0.0
    %385 = vmatpush1.msra.mxu0 0.0
    %386 = vmatprep.subr.mxu0 0.0
    %387 = vmatpush1.msra.mxu0 0.0
    %388 = vmatprep.subr.mxu0 0.0
    %389 = vmatpush1.msra.mxu0 0.0
    %390 = vmatprep.subr.mxu0 0.0
    %391 = vmatpush1.msra.mxu0 0.0
    %392 = vmatprep.subr.mxu0 0.0
    %393 = vmatpush1.msra.mxu0 0.0
    %394 = vmatprep.subr.mxu0 0.0
    %395 = vmatpush1.msra.mxu0 %v321
    %396 = vmatprep.subr.mxu0 0.0
    %397 = vmatpush1.msra.mxu0 %v320
    %398 = vmatprep.subr.mxu0 0.0
    %399 = vmatpush1.msra.mxu0 %v319
    %400 = vmatprep.subr.mxu0 0.0
    %401 = vmatpush1.msra.mxu0 %v318
    %402 = vmatprep.subr.mxu0 0.0
    %403 = vmatpush1.msra.mxu0 %v317
    %404 = vmatprep.subr.mxu0 0.0
    %405 = vmatpush2.msra.mxu0 0.0
    %406 = vmatprep.subr.mxu0 0.0
    %407 = vmatpush2.msra.mxu0 0.0
    %408 = vmatprep.subr.mxu0 0.0
    %409 = vmatpush2.msra.mxu0 0.0
    %410 = vmatprep.subr.mxu0 0.0
    %411 = vmatpush2.msra.mxu0 0.0
    %412 = vmatprep.subr.mxu0 0.0
    %413 = vmatpush2.msra.mxu0 0.0
    %414 = vmatprep.subr.mxu0 0.0
    %415 = vmatpush2.msra.mxu0 0.0
    %416 = vmatprep.subr.mxu0 0.0
    %417 = vmatpush2.msra.mxu0 0.0
    %418 = vmatprep.subr.mxu0 0.0
    %419 = vmatpush2.msra.mxu0 0.0
    %420 = vmatprep.subr.mxu0 0.0
    %421 = vmatpush2.msra.mxu0 0.0
    %422 = vmatprep.subr.mxu0 0.0
    %423 = vmatpush2.msra.mxu0 0.0
    %424 = vmatprep.subr.mxu0 0.0
    %425 = vmatpush2.msra.mxu0 0.0
    %426 = vmatprep.subr.mxu0 0.0
    %427 = vmatpush2.msra.mxu0 0.0
    %428 = vmatprep.subr.mxu0 0.0
    %429 = vmatpush2.msra.mxu0 0.0
    %430 = vmatprep.subr.mxu0 0.0
    %431 = vmatpush2.msra.mxu0 0.0
    %432 = vmatprep.subr.mxu0 0.0
    %433 = vmatpush2.msra.mxu0 0.0
    %434 = vmatprep.subr.mxu0 0.0
    %435 = vmatpush2.msra.mxu0 0.0
    %436 = vmatprep.mubr.f32.mxu0 0.0
    %437 = vmatmul.mubr.f32.gmra.mxu0 %v358
    %v438 = vpop.f32.mrf.mxu0
    %v439 = vadd.f32 %v335, %v438
    %v440 = vpop.f32.mrf.mxu0
    %441 = vmatprep.mubr.f32.mxu0 0.0
    %442 = vmatmul.mubr.f32.gmra.mxu0 %v361
    %v443 = vpop.f32.mrf.mxu0
    %v444 = vadd.f32 %v340, %v443
    %v445 = vpop.f32.mrf.mxu0
    %446 = vmatprep.mubr.f32.mxu0 0.0
    %447 = vmatmul.mubr.f32.gmra.mxu0 %v364
    %v448 = vpop.f32.mrf.mxu0
    %v449 = vadd.f32 %v345, %v448
    %v450 = vpop.f32.mrf.mxu0
    %451 = vmatprep.mubr.f32.mxu0 0.0
    %452 = vmatmul.mubr.f32.gmra.mxu0 %v367
    %v453 = vpop.f32.mrf.mxu0
    %v454 = vadd.f32 %v350, %v453
    %v455 = vpop.f32.mrf.mxu0
    %456 = vmatprep.mubr.f32.mxu0 0.0
    %457 = vmatmul.mubr.f32.gmra.mxu0 %v370
    %v458 = vpop.f32.mrf.mxu0
    %v459 = vadd.f32 %v355, %v458
    %v460 = vpop.f32.mrf.mxu0
    %461 = vdwg.mxu0
    %v462 = vtanh.pop %v439
    %v463 = vtanh.pop %v444
    %v464 = vtanh.pop %v449
    %v465 = vtanh.pop %v454
    %v466 = vtanh.pop %v459
    %v467 = vld [vmem:[%s9] sm:$0xff]
    %v468 = vld [vmem:[%s9 + $0x8] sm:$0xff]
    %v469 = vld [vmem:[%s9 + $0x10] sm:$0xff]
    %v470 = vld [vmem:[%s9 + $0x18] sm:$0xff]
    %v471 = vld [vmem:[%s9 + $0x20] sm:$0xff]
    %v472 = vld [vmem:[%s10] sm:$0xff]
    %v473 = vld [vmem:[%s10 + $0x8] sm:$0xff]
    %v474 = vld [vmem:[%s10 + $0x10] sm:$0xff]
    %v475 = vld [vmem:[%s10 + $0x18] sm:$0xff]
    %v476 = vld [vmem:[%s10 + $0x20] sm:$0xff]
    %478 = vset.pattern.permute.xlu0 0
    %479 = vperm.xlu0 %478, %v472
    %v480 = vpop.permute.xlu0 %479
    %483 = vset.pattern.permute.xlu0 0
    %484 = vperm.xlu0 %483, %v473
    %v485 = vpop.permute.xlu0 %484
    %488 = vset.pattern.permute.xlu0 0
    %489 = vperm.xlu0 %488, %v474
    %v490 = vpop.permute.xlu0 %489
    %493 = vset.pattern.permute.xlu0 0
    %494 = vperm.xlu0 %493, %v475
    %v495 = vpop.permute.xlu0 %494
    %498 = vset.pattern.permute.xlu0 0
    %499 = vperm.xlu0 %498, %v476
    %v500 = vpop.permute.xlu0 %499
    %v503 = vsel %vm211, %v467, 0
    %v506 = vsel %vm211, %v468, 0
    %v509 = vsel %vm211, %v469, 0
    %v512 = vsel %vm211, %v470, 0
    %v515 = vsel %vm211, %v471, 0
    %517 = vmatprep.subr.mxu0 0.0
    %518 = vmatpush1.msra.mxu0 0.0
    %519 = vmatprep.subr.mxu0 0.0
    %520 = vmatpush1.msra.mxu0 0.0
    %521 = vmatprep.subr.mxu0 0.0
    %522 = vmatpush1.msra.mxu0 0.0
    %523 = vmatprep.subr.mxu0 0.0
    %524 = vmatpush1.msra.mxu0 0.0
    %525 = vmatprep.subr.mxu0 0.0
    %526 = vmatpush1.msra.mxu0 0.0
    %527 = vmatprep.subr.mxu0 0.0
    %528 = vmatpush1.msra.mxu0 0.0
    %529 = vmatprep.subr.mxu0 0.0
    %530 = vmatpush1.msra.mxu0 0.0
    %531 = vmatprep.subr.mxu0 0.0
    %532 = vmatpush1.msra.mxu0 0.0
    %533 = vmatprep.subr.mxu0 0.0
    %534 = vmatpush1.msra.mxu0 0.0
    %535 = vmatprep.subr.mxu0 0.0
    %536 = vmatpush1.msra.mxu0 0.0
    %537 = vmatprep.subr.mxu0 0.0
    %538 = vmatpush1.msra.mxu0 0.0
    %539 = vmatprep.subr.mxu0 0.0
    %540 = vmatpush1.msra.mxu0 %v466
    %541 = vmatprep.subr.mxu0 0.0
    %542 = vmatpush1.msra.mxu0 %v465
    %543 = vmatprep.subr.mxu0 0.0
    %544 = vmatpush1.msra.mxu0 %v464
    %545 = vmatprep.subr.mxu0 0.0
    %546 = vmatpush1.msra.mxu0 %v463
    %547 = vmatprep.subr.mxu0 0.0
    %548 = vmatpush1.msra.mxu0 %v462
    %549 = vmatprep.subr.mxu0 0.0
    %550 = vmatpush2.msra.mxu0 0.0
    %551 = vmatprep.subr.mxu0 0.0
    %552 = vmatpush2.msra.mxu0 0.0
    %553 = vmatprep.subr.mxu0 0.0
    %554 = vmatpush2.msra.mxu0 0.0
    %555 = vmatprep.subr.mxu0 0.0
    %556 = vmatpush2.msra.mxu0 0.0
    %557 = vmatprep.subr.mxu0 0.0
    %558 = vmatpush2.msra.mxu0 0.0
    %559 = vmatprep.subr.mxu0 0.0
    %560 = vmatpush2.msra.mxu0 0.0
    %561 = vmatprep.subr.mxu0 0.0
    %562 = vmatpush2.msra.mxu0 0.0
    %563 = vmatprep.subr.mxu0 0.0
    %564 = vmatpush2.msra.mxu0 0.0
    %565 = vmatprep.subr.mxu0 0.0
    %566 = vmatpush2.msra.mxu0 0.0
    %567 = vmatprep.subr.mxu0 0.0
    %568 = vmatpush2.msra.mxu0 0.0
    %569 = vmatprep.subr.mxu0 0.0
    %570 = vmatpush2.msra.mxu0 0.0
    %571 = vmatprep.subr.mxu0 0.0
    %572 = vmatpush2.msra.mxu0 0.0
    %573 = vmatprep.subr.mxu0 0.0
    %574 = vmatpush2.msra.mxu0 0.0
    %575 = vmatprep.subr.mxu0 0.0
    %576 = vmatpush2.msra.mxu0 0.0
    %577 = vmatprep.subr.mxu0 0.0
    %578 = vmatpush2.msra.mxu0 0.0
    %579 = vmatprep.subr.mxu0 0.0
    %580 = vmatpush2.msra.mxu0 0.0
    %581 = vmatprep.mubr.f32.mxu0 0.0
    %582 = vmatmul.mubr.f32.gmra.mxu0 %v503
    %v583 = vpop.f32.mrf.mxu0
    %v584 = vadd.f32 %v480, %v583
    %v585 = vpop.f32.mrf.mxu0
    %586 = vmatprep.mubr.f32.mxu0 0.0
    %587 = vmatmul.mubr.f32.gmra.mxu0 %v506
    %v588 = vpop.f32.mrf.mxu0
    %v589 = vadd.f32 %v485, %v588
    %v590 = vpop.f32.mrf.mxu0
    %591 = vmatprep.mubr.f32.mxu0 0.0
    %592 = vmatmul.mubr.f32.gmra.mxu0 %v509
    %v593 = vpop.f32.mrf.mxu0
    %v594 = vadd.f32 %v490, %v593
    %v595 = vpop.f32.mrf.mxu0
    %596 = vmatprep.mubr.f32.mxu0 0.0
    %597 = vmatmul.mubr.f32.gmra.mxu0 %v512
    %v598 = vpop.f32.mrf.mxu0
    %v599 = vadd.f32 %v495, %v598
    %v600 = vpop.f32.mrf.mxu0
    %601 = vmatprep.mubr.f32.mxu0 0.0
    %602 = vmatmul.mubr.f32.gmra.mxu0 %v515
    %v603 = vpop.f32.mrf.mxu0
    %v604 = vadd.f32 %v500, %v603
    %v605 = vpop.f32.mrf.mxu0
    %606 = vdwg.mxu0
    %v607 = vtanh.pop %v584
    %v608 = vtanh.pop %v589
    %v609 = vtanh.pop %v594
    %v610 = vtanh.pop %v599
    %v611 = vtanh.pop %v604
    %v612 = vld [vmem:[%s11] sm:$0xff]
    %v614 = vsel %vm211, %v612, 0
    %616 = vmatprep.subr.mxu0 0.0
    %617 = vmatpush1.msra.mxu0 0.0
    %618 = vmatprep.subr.mxu0 0.0
    %619 = vmatpush1.msra.mxu0 0.0
    %620 = vmatprep.subr.mxu0 0.0
    %621 = vmatpush1.msra.mxu0 0.0
    %622 = vmatprep.subr.mxu0 0.0
    %623 = vmatpush1.msra.mxu0 0.0
    %624 = vmatprep.subr.mxu0 0.0
    %625 = vmatpush1.msra.mxu0 0.0
    %626 = vmatprep.subr.mxu0 0.0
    %627 = vmatpush1.msra.mxu0 0.0
    %628 = vmatprep.subr.mxu0 0.0
    %629 = vmatpush1.msra.mxu0 0.0
    %630 = vmatprep.subr.mxu0 0.0
    %631 = vmatpush1.msra.mxu0 0.0
    %632 = vmatprep.subr.mxu0 0.0
    %633 = vmatpush1.msra.mxu0 0.0
    %634 = vmatprep.subr.mxu0 0.0
    %635 = vmatpush1.msra.mxu0 0.0
    %636 = vmatprep.subr.mxu0 0.0
    %637 = vmatpush1.msra.mxu0 0.0
    %638 = vmatprep.subr.mxu0 0.0
    %639 = vmatpush1.msra.mxu0 %v611
    %640 = vmatprep.subr.mxu0 0.0
    %641 = vmatpush1.msra.mxu0 %v610
    %642 = vmatprep.subr.mxu0 0.0
    %643 = vmatpush1.msra.mxu0 %v609
    %644 = vmatprep.subr.mxu0 0.0
    %645 = vmatpush1.msra.mxu0 %v608
    %646 = vmatprep.subr.mxu0 0.0
    %647 = vmatpush1.msra.mxu0 %v607
    %648 = vmatprep.subr.mxu0 0.0
    %649 = vmatpush2.msra.mxu0 0.0
    %650 = vmatprep.subr.mxu0 0.0
    %651 = vmatpush2.msra.mxu0 0.0
    %652 = vmatprep.subr.mxu0 0.0
    %653 = vmatpush2.msra.mxu0 0.0
    %654 = vmatprep.subr.mxu0 0.0
    %655 = vmatpush2.msra.mxu0 0.0
    %656 = vmatprep.subr.mxu0 0.0
    %657 = vmatpush2.msra.mxu0 0.0
    %658 = vmatprep.subr.mxu0 0.0
    %659 = vmatpush2.msra.mxu0 0.0
    %660 = vmatprep.subr.mxu0 0.0
    %661 = vmatpush2.msra.mxu0 0.0
    %662 = vmatprep.subr.mxu0 0.0
    %663 = vmatpush2.msra.mxu0 0.0
    %664 = vmatprep.subr.mxu0 0.0
    %665 = vmatpush2.msra.mxu0 0.0
    %666 = vmatprep.subr.mxu0 0.0
    %667 = vmatpush2.msra.mxu0 0.0
    %668 = vmatprep.subr.mxu0 0.0
    %669 = vmatpush2.msra.mxu0 0.0
    %670 = vmatprep.subr.mxu0 0.0
    %671 = vmatpush2.msra.mxu0 0.0
    %672 = vmatprep.subr.mxu0 0.0
    %673 = vmatpush2.msra.mxu0 0.0
    %674 = vmatprep.subr.mxu0 0.0
    %675 = vmatpush2.msra.mxu0 0.0
    %676 = vmatprep.subr.mxu0 0.0
    %677 = vmatpush2.msra.mxu0 0.0
    %678 = vmatprep.subr.mxu0 0.0
    %679 = vmatpush2.msra.mxu0 0.0
    %680 = vmatprep.mubr.f32.mxu0 0.0
    %681 = vmatmul.mubr.f32.gmra.mxu0 %v614
    %v682 = vpop.f32.mrf.mxu0
    %v683 = vadd.f32 0.0, %v682
    %v684 = vpop.f32.mrf.mxu0
    %685 = vdwg.mxu0
    %v686 = vld [vmem:[#allocation2] sm:$0x1]
    %688 = vset.pattern.permute.xlu0 0
    %689 = vperm.xlu0 %688, %v686
    %v690 = vpop.permute.xlu0 %689
    %v692 = vlaneseq
    %v693 = vshrl.u32 %v692, 7
    %v694 = vsub.s32 0, %v693
    %v695 = vrot.slane %v690, %v694
    %v696 = vadd.f32 %v683, %v695
    %697 = vst [vmem:[#allocation3] sm:$0x1] %v696
    // Predicated region
    $region54: #{tpu_custom_call.1} parent=1 // pred_check
      _
    $region55: #{tpu_custom_call.1} parent=1 // pred_check_branch
      %699 = sbr.rel (0) target = $region57
    $region56: #{tpu_custom_call.1} parent=1 // pred_region
      %s701 = ssub.s32 16, 16
      %702 = vsyncadd [#allocation4], %s701
      %s704 = sshll.u32 [#allocation3], 4
      %s705 = int_to_ptr.vmem [resolvable:$true] %s704
      %707 = dma.vmem_to_hbm [thread:$0]  %s705, 16, %s13, [#allocation4]
    $region57: #{tpu_custom_call.1} parent=1 // pred_fallthru
      _
    // Predicated region
    $region58: #{tpu_custom_call.1} parent=1 // pred_check
      _
    $region59: #{tpu_custom_call.1} parent=1 // pred_check_branch
      %709 = sbr.rel (0) target = $region61
    $region60: #{tpu_custom_call.1} parent=1 // pred_region
      %710 = dma.done [#allocation4], 16
    $region61: #{tpu_custom_call.1} parent=1 // pred_fallthru
      _
    %711 = vsyncpa [#allocation4], 1

</llo_original>
